<compile_context>
chip_gen: v5e
topology: v5e:2x2
jax: 0.10.0
libtpu: 0.0.40
codegen_flags: <defaults>
</compile_context>

<pallas_src>
import jax
import jax.numpy as jnp
from jax.experimental import pallas as pl
from jax.experimental.pallas import tpu as pltpu

IN_F, H1, H2, H3, OUT_F = 100, 50, 25, 10, 1


def mlp_kernel(x_ref, w1_ref, b1_ref, w2_ref, b2_ref,
               w3_ref, b3_ref, w4_ref, b4_ref, o_ref):
    """Fused 4-layer MLP on one batch tile. Weights are VMEM-resident."""

    def sigmoid_tanh(h):
        # sigmoid(h) = 0.5 * tanh(0.5 * h) + 0.5 : a single EUP op per vreg.
        # h is bf16 -> bf16 VPU/EUP on v6e/v7x (half the vregs), exact-enough
        # for the (0, 1)-bounded activations here.
        return 0.5 * jnp.tanh(0.5 * h) + 0.5

    # Cast x in-kernel (no separate wrapper pad/cast pass over HBM).
    x = x_ref[...].astype(jnp.bfloat16)

    # fc1: (TB, 100) @ (100, 50) -- bf16 MXU, f32 accumulation.
    h = jnp.dot(x, w1_ref[...], preferred_element_type=jnp.float32)
    h = sigmoid_tanh(h.astype(jnp.bfloat16) + b1_ref[...])

    # fc2: (TB, 50) @ (50, 25)
    h = jnp.dot(h, w2_ref[...], preferred_element_type=jnp.float32)
    h = sigmoid_tanh(h.astype(jnp.bfloat16) + b2_ref[...])

    # fc3: (TB, 25) @ (25, 10)
    h = jnp.dot(h, w3_ref[...], preferred_element_type=jnp.float32)
    h = sigmoid_tanh(h.astype(jnp.bfloat16) + b3_ref[...])

    # fc4: (TB, 10) @ (10, 1) on the MXU (frees VPU/XLU), exact final sigmoid.
    z = jnp.dot(h, w4_ref[...], preferred_element_type=jnp.float32) + b4_ref[...]
    o_ref[...] = jax.nn.sigmoid(z).astype(o_ref.dtype)


def _ceil_to(v, m):
    return ((v + m - 1) // m) * m


def net_forward(x, params, *, block_b=8192):
    (w1, b1), (w2, b2), (w3, b3), (w4, b4) = params
    B, F = x.shape
    assert F == IN_F

    # Only the (tiny, VMEM-resident) weights/biases are pre-cast; x stays f32
    # in HBM and is cast in-kernel.
    w1b = w1.astype(jnp.bfloat16)
    w2b = w2.astype(jnp.bfloat16)
    w3b = w3.astype(jnp.bfloat16)
    w4b = w4.astype(jnp.bfloat16)
    b1b = b1.astype(jnp.bfloat16)
    b2b = b2.astype(jnp.bfloat16)
    b3b = b3.astype(jnp.bfloat16)
    b4f = b4.astype(jnp.float32)

    # Pick the batch tile: large enough to amortize per-step overhead, but
    # with >= 2 grid steps when possible so the "parallel" axis can shard
    # across both v7x TensorCores.  Tile rows stay a multiple of 8 (sublanes)
    # unless the whole batch fits in one block.
    if B <= 16:
        tb = B
    else:
        tb = min(block_b, max(8, _ceil_to(pl.cdiv(B, 2), 8)))
    grid = (pl.cdiv(B, tb),)

    def resident(arr):
        # Full-array block, constant index_map -> stays in VMEM, DMA'd once.
        return pl.BlockSpec(arr.shape, lambda i: (0, 0))

    return pl.pallas_call(
        mlp_kernel,
        out_shape=jax.ShapeDtypeStruct((B, OUT_F), jnp.float32),
        grid=grid,
        in_specs=[
            pl.BlockSpec((tb, IN_F), lambda i: (i, 0)),   # batch-tiled x (f32)
            resident(w1b), resident(b1b),
            resident(w2b), resident(b2b),
            resident(w3b), resident(b3b),
            resident(w4b), resident(b4f),
        ],
        out_specs=pl.BlockSpec((tb, OUT_F), lambda i: (i, 0)),
        compiler_params=pltpu.CompilerParams(
            dimension_semantics=("parallel",),
            vmem_limit_bytes=48 * 1024 * 1024),
    )(x, w1b, b1b, w2b, b2b, w3b, b3b, w4b, b4f)


def init_params(key):
    """Deterministic init mimicking nn.Linear default (uniform +/- 1/sqrt(fan_in)).

    Weights stored as (in_features, out_features) so the kernel computes
    x @ W + b, equivalent to PyTorch's x @ W.T + b with its (out, in) layout.
    """
    dims = [(IN_F, H1), (H1, H2), (H2, H3), (H3, OUT_F)]
    params = []
    for (fan_in, fan_out) in dims:
        key, kw, kb = jax.random.split(key, 3)
        bound = 1.0 / jnp.sqrt(fan_in)
        w = jax.random.uniform(kw, (fan_in, fan_out), jnp.float32, -bound, bound)
        b = jax.random.uniform(kb, (1, fan_out), jnp.float32, -bound, bound)
        params.append((w, b))
    return params


def reference_forward(x, params):
    h = x
    for (w, b) in params:
        h = jax.nn.sigmoid(h @ w + b)
    return h


if __name__ == "__main__":
    key = jax.random.PRNGKey(0)
    key, kx = jax.random.split(key)

    # Small shape consistent with the module (batch=8, features=100).
    B = 8
    x = jax.random.normal(kx, (B, IN_F), jnp.float32)
    params = init_params(key)

    out = jax.block_until_ready(net_forward(x, params))
    ref = reference_forward(x, params)
    assert out.shape == (B, OUT_F), out.shape
    # bf16 weights/activations on the hidden layers -> loose but meaningful
    # tolerance (sigmoid outputs are in (0, 1)).
    assert jnp.allclose(out, ref, atol=2e-2, rtol=2e-2), float(
        jnp.max(jnp.abs(out - ref)))

    # Also exercise the multi-step batch grid (pipelined path, 2 tiles of 1024).
    key, kx2 = jax.random.split(key)
    B2 = 2048
    x2 = jax.random.normal(kx2, (B2, IN_F), jnp.float32)
    out2 = jax.block_until_ready(net_forward(x2, params))
    ref2 = reference_forward(x2, params)
    assert out2.shape == (B2, OUT_F), out2.shape
    assert jnp.allclose(out2, ref2, atol=2e-2, rtol=2e-2), float(
        jnp.max(jnp.abs(out2 - ref2)))

    print("KERNEL_OK")
</pallas_src>

<mosaic_0001>
module attributes {stable_mosaic.version = 11 : i64} {
  func.func @mlp_kernel(%arg0: i32, %arg1: memref<8x100xf32, #tpu.memory_space<vmem>>, %arg2: memref<100x50xbf16, #tpu.memory_space<vmem>>, %arg3: memref<1x50xbf16, #tpu.memory_space<vmem>>, %arg4: memref<50x25xbf16, #tpu.memory_space<vmem>>, %arg5: memref<1x25xbf16, #tpu.memory_space<vmem>>, %arg6: memref<25x10xbf16, #tpu.memory_space<vmem>>, %arg7: memref<1x10xbf16, #tpu.memory_space<vmem>>, %arg8: memref<10x1xbf16, #tpu.memory_space<vmem>>, %arg9: memref<1x1xf32, #tpu.memory_space<vmem>>, %arg10: memref<8x1xf32, #tpu.memory_space<vmem>>) attributes {dimension_semantics = [#tpu.dimension_semantics<parallel>], iteration_bounds = array<i64: 1>, scalar_prefetch = 0 : i64, scratch_operands = 0 : i64, tpu.core_type = #tpu.core_type<tc>, window_params = [{transform_indices = @transform_0, window_bounds = array<i64: 8, 100>}, {pipeline_mode = #tpu.pipeline_mode<synchronous>, transform_indices = @transform_1, window_bounds = array<i64: 100, 50>}, {pipeline_mode = #tpu.pipeline_mode<synchronous>, transform_indices = @transform_2, window_bounds = array<i64: 1, 50>}, {pipeline_mode = #tpu.pipeline_mode<synchronous>, transform_indices = @transform_3, window_bounds = array<i64: 50, 25>}, {pipeline_mode = #tpu.pipeline_mode<synchronous>, transform_indices = @transform_4, window_bounds = array<i64: 1, 25>}, {pipeline_mode = #tpu.pipeline_mode<synchronous>, transform_indices = @transform_5, window_bounds = array<i64: 25, 10>}, {pipeline_mode = #tpu.pipeline_mode<synchronous>, transform_indices = @transform_6, window_bounds = array<i64: 1, 10>}, {pipeline_mode = #tpu.pipeline_mode<synchronous>, transform_indices = @transform_7, window_bounds = array<i64: 10, 1>}, {pipeline_mode = #tpu.pipeline_mode<synchronous>, transform_indices = @transform_8, window_bounds = array<i64: 1, 1>}, {transform_indices = @transform_9, window_bounds = array<i64: 8, 1>}]} {
    %c0 = arith.constant 0 : index
    %c0_0 = arith.constant 0 : index
    %0 = vector.load %arg1[%c0, %c0_0] : memref<8x100xf32, #tpu.memory_space<vmem>>, vector<8x100xf32>
    %1 = arith.truncf %0 : vector<8x100xf32> to vector<8x100xbf16>
    %c0_1 = arith.constant 0 : index
    %c0_2 = arith.constant 0 : index
    %2 = vector.load %arg2[%c0_1, %c0_2] : memref<100x50xbf16, #tpu.memory_space<vmem>>, vector<100x50xbf16>
    %cst = arith.constant dense<0.000000e+00> : vector<8x50xf32>
    %3 = tpu.matmul %1, %2, %cst {dimension_numbers = #tpu.dot_dimension_numbers<[1], [0], [0], [1], [0, 0, 1, 1], [], []>} : vector<8x100xbf16>, vector<100x50xbf16>, vector<8x50xf32> -> vector<8x50xf32>
    %4 = arith.truncf %3 : vector<8x50xf32> to vector<8x50xbf16>
    %c0_3 = arith.constant 0 : index
    %c0_4 = arith.constant 0 : index
    %5 = vector.load %arg3[%c0_3, %c0_4] : memref<1x50xbf16, #tpu.memory_space<vmem>>, vector<1x50xbf16>
    %6 = vector.broadcast %5 : vector<1x50xbf16> to vector<8x50xbf16>
    %7 = arith.addf %4, %6 : vector<8x50xbf16>
    %cst_5 = arith.constant 5.000000e-01 : bf16
    %8 = vector.broadcast %cst_5 : bf16 to vector<8x50xbf16>
    %9 = arith.mulf %8, %7 : vector<8x50xbf16>
    %10 = math.tanh %9 : vector<8x50xbf16>
    %cst_6 = arith.constant 5.000000e-01 : bf16
    %11 = vector.broadcast %cst_6 : bf16 to vector<8x50xbf16>
    %12 = arith.mulf %11, %10 : vector<8x50xbf16>
    %cst_7 = arith.constant 5.000000e-01 : bf16
    %13 = vector.broadcast %cst_7 : bf16 to vector<8x50xbf16>
    %14 = arith.addf %12, %13 : vector<8x50xbf16>
    %c0_8 = arith.constant 0 : index
    %c0_9 = arith.constant 0 : index
    %15 = vector.load %arg4[%c0_8, %c0_9] : memref<50x25xbf16, #tpu.memory_space<vmem>>, vector<50x25xbf16>
    %cst_10 = arith.constant dense<0.000000e+00> : vector<8x25xf32>
    %16 = tpu.matmul %14, %15, %cst_10 {dimension_numbers = #tpu.dot_dimension_numbers<[1], [0], [0], [1], [0, 0, 1, 1], [], []>} : vector<8x50xbf16>, vector<50x25xbf16>, vector<8x25xf32> -> vector<8x25xf32>
    %17 = arith.truncf %16 : vector<8x25xf32> to vector<8x25xbf16>
    %c0_11 = arith.constant 0 : index
    %c0_12 = arith.constant 0 : index
    %18 = vector.load %arg5[%c0_11, %c0_12] : memref<1x25xbf16, #tpu.memory_space<vmem>>, vector<1x25xbf16>
    %19 = vector.broadcast %18 : vector<1x25xbf16> to vector<8x25xbf16>
    %20 = arith.addf %17, %19 : vector<8x25xbf16>
    %cst_13 = arith.constant 5.000000e-01 : bf16
    %21 = vector.broadcast %cst_13 : bf16 to vector<8x25xbf16>
    %22 = arith.mulf %21, %20 : vector<8x25xbf16>
    %23 = math.tanh %22 : vector<8x25xbf16>
    %cst_14 = arith.constant 5.000000e-01 : bf16
    %24 = vector.broadcast %cst_14 : bf16 to vector<8x25xbf16>
    %25 = arith.mulf %24, %23 : vector<8x25xbf16>
    %cst_15 = arith.constant 5.000000e-01 : bf16
    %26 = vector.broadcast %cst_15 : bf16 to vector<8x25xbf16>
    %27 = arith.addf %25, %26 : vector<8x25xbf16>
    %c0_16 = arith.constant 0 : index
    %c0_17 = arith.constant 0 : index
    %28 = vector.load %arg6[%c0_16, %c0_17] : memref<25x10xbf16, #tpu.memory_space<vmem>>, vector<25x10xbf16>
    %cst_18 = arith.constant dense<0.000000e+00> : vector<8x10xf32>
    %29 = tpu.matmul %27, %28, %cst_18 {dimension_numbers = #tpu.dot_dimension_numbers<[1], [0], [0], [1], [0, 0, 1, 1], [], []>} : vector<8x25xbf16>, vector<25x10xbf16>, vector<8x10xf32> -> vector<8x10xf32>
    %30 = arith.truncf %29 : vector<8x10xf32> to vector<8x10xbf16>
    %c0_19 = arith.constant 0 : index
    %c0_20 = arith.constant 0 : index
    %31 = vector.load %arg7[%c0_19, %c0_20] : memref<1x10xbf16, #tpu.memory_space<vmem>>, vector<1x10xbf16>
    %32 = vector.broadcast %31 : vector<1x10xbf16> to vector<8x10xbf16>
    %33 = arith.addf %30, %32 : vector<8x10xbf16>
    %cst_21 = arith.constant 5.000000e-01 : bf16
    %34 = vector.broadcast %cst_21 : bf16 to vector<8x10xbf16>
    %35 = arith.mulf %34, %33 : vector<8x10xbf16>
    %36 = math.tanh %35 : vector<8x10xbf16>
    %cst_22 = arith.constant 5.000000e-01 : bf16
    %37 = vector.broadcast %cst_22 : bf16 to vector<8x10xbf16>
    %38 = arith.mulf %37, %36 : vector<8x10xbf16>
    %cst_23 = arith.constant 5.000000e-01 : bf16
    %39 = vector.broadcast %cst_23 : bf16 to vector<8x10xbf16>
    %40 = arith.addf %38, %39 : vector<8x10xbf16>
    %c0_24 = arith.constant 0 : index
    %c0_25 = arith.constant 0 : index
    %41 = vector.load %arg8[%c0_24, %c0_25] : memref<10x1xbf16, #tpu.memory_space<vmem>>, vector<10x1xbf16>
    %cst_26 = arith.constant dense<0.000000e+00> : vector<8x1xf32>
    %42 = tpu.matmul %40, %41, %cst_26 {dimension_numbers = #tpu.dot_dimension_numbers<[1], [0], [0], [1], [0, 0, 1, 1], [], []>} : vector<8x10xbf16>, vector<10x1xbf16>, vector<8x1xf32> -> vector<8x1xf32>
    %c0_27 = arith.constant 0 : index
    %c0_28 = arith.constant 0 : index
    %43 = vector.load %arg9[%c0_27, %c0_28] : memref<1x1xf32, #tpu.memory_space<vmem>>, vector<1x1xf32>
    %44 = vector.broadcast %43 : vector<1x1xf32> to vector<8x1xf32>
    %45 = arith.addf %42, %44 : vector<8x1xf32>
    %46 = arith.negf %45 : vector<8x1xf32>
    %47 = math.exp %46 : vector<8x1xf32>
    %cst_29 = arith.constant 1.000000e+00 : f32
    %48 = vector.broadcast %cst_29 : f32 to vector<8x1xf32>
    %49 = arith.addf %48, %47 : vector<8x1xf32>
    %50 = arith.divf %48, %49 : vector<8x1xf32>
    %c0_30 = arith.constant 0 : index
    %c0_31 = arith.constant 0 : index
    %51 = vector.load %arg10[%c0_30, %c0_31] : memref<8x1xf32, #tpu.memory_space<vmem>>, vector<8x1xf32>
    tpu.vector_store %arg10[%c0_30, %c0_31], %50 {strides = array<i32>} : memref<8x1xf32, #tpu.memory_space<vmem>>, vector<8x1xf32>,
    return
  }
  func.func @transform_0(%arg0: i32) -> (i32, i32) {
    %c0_i32 = arith.constant 0 : i32
    %c0_i32_0 = arith.constant 0 : i32
    return %arg0, %c0_i32 : i32, i32
  }
  func.func @transform_1(%arg0: i32) -> (i32, i32) {
    %c0_i32 = arith.constant 0 : i32
    %c0_i32_0 = arith.constant 0 : i32
    %c0_i32_1 = arith.constant 0 : i32
    return %c0_i32, %c0_i32_0 : i32, i32
  }
  func.func @transform_2(%arg0: i32) -> (i32, i32) {
    %c0_i32 = arith.constant 0 : i32
    %c0_i32_0 = arith.constant 0 : i32
    %c0_i32_1 = arith.constant 0 : i32
    return %c0_i32, %c0_i32_0 : i32, i32
  }
  func.func @transform_3(%arg0: i32) -> (i32, i32) {
    %c0_i32 = arith.constant 0 : i32
    %c0_i32_0 = arith.constant 0 : i32
    %c0_i32_1 = arith.constant 0 : i32
    return %c0_i32, %c0_i32_0 : i32, i32
  }
  func.func @transform_4(%arg0: i32) -> (i32, i32) {
    %c0_i32 = arith.constant 0 : i32
    %c0_i32_0 = arith.constant 0 : i32
    %c0_i32_1 = arith.constant 0 : i32
    return %c0_i32, %c0_i32_0 : i32, i32
  }
  func.func @transform_5(%arg0: i32) -> (i32, i32) {
    %c0_i32 = arith.constant 0 : i32
    %c0_i32_0 = arith.constant 0 : i32
    %c0_i32_1 = arith.constant 0 : i32
    return %c0_i32, %c0_i32_0 : i32, i32
  }
  func.func @transform_6(%arg0: i32) -> (i32, i32) {
    %c0_i32 = arith.constant 0 : i32
    %c0_i32_0 = arith.constant 0 : i32
    %c0_i32_1 = arith.constant 0 : i32
    return %c0_i32, %c0_i32_0 : i32, i32
  }
  func.func @transform_7(%arg0: i32) -> (i32, i32) {
    %c0_i32 = arith.constant 0 : i32
    %c0_i32_0 = arith.constant 0 : i32
    %c0_i32_1 = arith.constant 0 : i32
    return %c0_i32, %c0_i32_0 : i32, i32
  }
  func.func @transform_8(%arg0: i32) -> (i32, i32) {
    %c0_i32 = arith.constant 0 : i32
    %c0_i32_0 = arith.constant 0 : i32
    %c0_i32_1 = arith.constant 0 : i32
    return %c0_i32, %c0_i32_0 : i32, i32
  }
  func.func @transform_9(%arg0: i32) -> (i32, i32) {
    %c0_i32 = arith.constant 0 : i32
    %c0_i32_0 = arith.constant 0 : i32
    return %arg0, %c0_i32 : i32, i32
  }
}

</mosaic_0001>

<llo_original>
// kernel: tpu_custom_call.1
$region0: #{tpu_custom_call.1}
  #allocation0 [shape = 'u32[]', space=smem, size = 0x4, offset = 0x4, fixed_abs, tag = 'smem constant byte address 0x4 - core index']
  #allocation1 [shape = 'u32[72,128]{1,0:T(1,128)}', space=vmem, size = 0x9000, scoped, tag = 'internal scratch']
  #allocation2 [shape = 'f32[1,1]{1,0:T(1,128)S(1)}', space=vmem, size = 0x200, scoped, tag = 'scoped memory for tpu_custom_call.1']
  %s0 = inlined_call_operand.vmem [shape: f32[8,100], index: 0, kind: input, shape index: {}]
  %s1 = inlined_call_operand.vmem [shape: bf16[100,50], index: 1, kind: input, shape index: {}]
  %s2 = inlined_call_operand.vmem [shape: bf16[1,50], index: 2, kind: input, shape index: {}]
  %s3 = inlined_call_operand.vmem [shape: bf16[50,25], index: 3, kind: input, shape index: {}]
  %s4 = inlined_call_operand.vmem [shape: bf16[1,25], index: 4, kind: input, shape index: {}]
  %s5 = inlined_call_operand.vmem [shape: bf16[25,10], index: 5, kind: input, shape index: {}]
  %s6 = inlined_call_operand.vmem [shape: bf16[1,10], index: 6, kind: input, shape index: {}]
  %s7 = inlined_call_operand.vmem [shape: bf16[10,1], index: 7, kind: input, shape index: {}]
  %s8 = inlined_call_operand.<no memory space> [shape: f32[1,1], index: 8, kind: input, shape index: {}]
  %s9 = inlined_call_operand.vmem [shape: f32[8,1], index: 9, kind: output, shape index: {}]
  %s10 = sld [smem:[#allocation0]]
  $region46: #{tpu_custom_call.1} parent=0
    _
  %s12 = ssub.s32 1, %s10
  %s13 = scalar_select 0, %s12, %s10
  %v14 = vstv %s8
  %15 = vst [vmem:[#allocation2] sm:$0x1] %v14
  // Predicated region
  $region2: #{tpu_custom_call.1} parent=0 // pred_check
    _
  $region3: #{tpu_custom_call.1} parent=0 // pred_check_branch
    %17 = sbr.rel (0) target = $region5
  $region4: #{tpu_custom_call.1} parent=0 // pred_region
    _
  $region5: #{tpu_custom_call.1} parent=0 // pred_fallthru
    _
  // Predicated region
  $region6: #{tpu_custom_call.1} parent=0 // pred_check
    _
  $region7: #{tpu_custom_call.1} parent=0 // pred_check_branch
    %19 = sbr.rel (0) target = $region9
  $region8: #{tpu_custom_call.1} parent=0 // pred_region
    _
  $region9: #{tpu_custom_call.1} parent=0 // pred_fallthru
    _
  // Predicated region
  $region10: #{tpu_custom_call.1} parent=0 // pred_check
    _
  $region11: #{tpu_custom_call.1} parent=0 // pred_check_branch
    %21 = sbr.rel (0) target = $region13
  $region12: #{tpu_custom_call.1} parent=0 // pred_region
    _
  $region13: #{tpu_custom_call.1} parent=0 // pred_fallthru
    _
  // Predicated region
  $region14: #{tpu_custom_call.1} parent=0 // pred_check
    _
  $region15: #{tpu_custom_call.1} parent=0 // pred_check_branch
    %23 = sbr.rel (0) target = $region17
  $region16: #{tpu_custom_call.1} parent=0 // pred_region
    _
  $region17: #{tpu_custom_call.1} parent=0 // pred_fallthru
    _
  // Predicated region
  $region18: #{tpu_custom_call.1} parent=0 // pred_check
    _
  $region19: #{tpu_custom_call.1} parent=0 // pred_check_branch
    %25 = sbr.rel (0) target = $region21
  $region20: #{tpu_custom_call.1} parent=0 // pred_region
    _
  $region21: #{tpu_custom_call.1} parent=0 // pred_fallthru
    _
  // Predicated region
  $region22: #{tpu_custom_call.1} parent=0 // pred_check
    _
  $region23: #{tpu_custom_call.1} parent=0 // pred_check_branch
    %27 = sbr.rel (0) target = $region25
  $region24: #{tpu_custom_call.1} parent=0 // pred_region
    _
  $region25: #{tpu_custom_call.1} parent=0 // pred_fallthru
    _
  // Predicated region
  $region26: #{tpu_custom_call.1} parent=0 // pred_check
    _
  $region27: #{tpu_custom_call.1} parent=0 // pred_check_branch
    %29 = sbr.rel (0) target = $region29
  $region28: #{tpu_custom_call.1} parent=0 // pred_region
    _
  $region29: #{tpu_custom_call.1} parent=0 // pred_fallthru
    _
  // Predicated region
  $region30: #{tpu_custom_call.1} parent=0 // pred_check
    _
  $region31: #{tpu_custom_call.1} parent=0 // pred_check_branch
    %31 = sbr.rel (0) target = $region33
  $region32: #{tpu_custom_call.1} parent=0 // pred_region
    _
  $region33: #{tpu_custom_call.1} parent=0 // pred_fallthru
    _
  // Predicated region
  $region34: #{tpu_custom_call.1} parent=0 // pred_check
    _
  $region35: #{tpu_custom_call.1} parent=0 // pred_check_branch
    %33 = sbr.rel (0) target = $region37
  $region36: #{tpu_custom_call.1} parent=0 // pred_region
    _
  $region37: #{tpu_custom_call.1} parent=0 // pred_fallthru
    _
  %v35 = vld [vmem:[%s0] sm:$0xff]
  %v36 = vpack.c.bf16 %v35, %v35
  %v37 = vld [vmem:[%s1] sm:$0xf]
  %v38 = vld [vmem:[%s1 + $0x4] sm:$0xf]
  %v39 = vld [vmem:[%s1 + $0x8] sm:$0xf]
  %v40 = vld [vmem:[%s1 + $0xc] sm:$0xf]
  %v41 = vld [vmem:[%s1 + $0x10] sm:$0xf]
  %v42 = vld [vmem:[%s1 + $0x14] sm:$0xf]
  %v43 = vld [vmem:[%s1 + $0x18] sm:$0xf]
  %v44 = vld [vmem:[%s1 + $0x1c] sm:$0xf]
  %v45 = vld [vmem:[%s1 + $0x20] sm:$0xf]
  %v46 = vld [vmem:[%s1 + $0x24] sm:$0xf]
  %v47 = vld [vmem:[%s1 + $0x28] sm:$0xf]
  %v48 = vld [vmem:[%s1 + $0x2c] sm:$0xf]
  %v49 = vld [vmem:[%s1 + $0x30] sm:$0x3]
  %v63 = vunpack.c.l.b16 %v37
  %v64 = vunpack.c.l.b16 %v38
  %v65 = vunpack.c.l.b16 %v39
  %v66 = vunpack.c.l.b16 %v40
  %v67 = vunpack.c.l.b16 %v41
  %v68 = vunpack.c.l.b16 %v42
  %v69 = vunpack.c.l.b16 %v43
  %v70 = vunpack.c.l.b16 %v44
  %v71 = vunpack.c.l.b16 %v45
  %v72 = vunpack.c.l.b16 %v46
  %v73 = vunpack.c.l.b16 %v47
  %v74 = vunpack.c.l.b16 %v48
  %v75 = vunpack.c.l.b16 %v49
  %v76 = vpack.c.b16 %v64, %v63
  %v77 = vpack.c.b16 %v66, %v65
  %v78 = vpack.c.b16 %v68, %v67
  %v79 = vpack.c.b16 %v70, %v69
  %v80 = vpack.c.b16 %v72, %v71
  %v81 = vpack.c.b16 %v74, %v73
  %v82 = vpack.c.b16 %v75, %v75
  %vm89 = vcmask 818176
  %v91 = vsel %vm89, %v36, 0
  %vm93 = vcmask 1041408
  %v95 = vsel %vm93, %v82, 0
  %97 = vmatpush.bf16.msra.mxu0 0
  %98 = vmatpush.bf16.msra.mxu0 %v95
  %99 = vmatpush.bf16.msra.mxu0 %v81
  %100 = vmatpush.bf16.msra.mxu0 %v80
  %101 = vmatpush.bf16.msra.mxu0 %v79
  %102 = vmatpush.bf16.msra.mxu0 %v78
  %103 = vmatpush.bf16.msra.mxu0 %v77
  %104 = vmatpush.bf16.msra.mxu0 %v76
  %105 = vmatmul.bf16.gmra.mxu0 %v91
  %v106 = vpop.f32.mrf.mxu0
  %v107 = vadd.f32 0.0, %v106
  %v108 = vpop.f32.mrf.mxu0
  %109 = vdwg.mxu0
  %v110 = vpack.c.bf16 %v107, %v107
  %v111 = vld [vmem:[%s2] sm:$0x1]
  %v113 = vpack.i.b16 %v111, %v111
  %v115 = vperm.slane %v113, 0
  %v116 = vunpack.c.l.bf16 %v110
  %v117 = vunpack.c.l.bf16 %v115
  %v118 = vadd.f32 %v116, %v117
  %v119 = vpack.c.bf16 %v118, %v118
  %v120 = vunpack.c.l.bf16 %v119
  %v121 = vmul.f32 %v120, 0.5
  %v122 = vpack.c.bf16 %v121, %v121
  %v123 = vunpack.c.l.bf16 %v122
  %v124 = vtanh.pop %v123
  %v125 = vpack.c.bf16 %v124, %v124
  %v126 = vunpack.c.l.bf16 %v125
  %v127 = vmul.f32 %v126, 0.5
  %v128 = vpack.c.bf16 %v127, %v127
  %v129 = vunpack.c.l.bf16 %v128
  %v130 = vadd.f32 %v129, 0.5
  %v131 = vpack.c.bf16 %v130, %v130
  %v132 = vld [vmem:[%s3] sm:$0xf]
  %v133 = vld [vmem:[%s3 + $0x4] sm:$0xf]
  %v134 = vld [vmem:[%s3 + $0x8] sm:$0xf]
  %v135 = vld [vmem:[%s3 + $0xc] sm:$0xf]
  %v136 = vld [vmem:[%s3 + $0x10] sm:$0xf]
  %v137 = vld [vmem:[%s3 + $0x14] sm:$0xf]
  %v138 = vld [vmem:[%s3 + $0x18] sm:$0x1]
  %v146 = vunpack.c.l.b16 %v132
  %v147 = vunpack.c.l.b16 %v133
  %v148 = vunpack.c.l.b16 %v134
  %v149 = vunpack.c.l.b16 %v135
  %v150 = vunpack.c.l.b16 %v136
  %v151 = vunpack.c.l.b16 %v137
  %v152 = vunpack.c.l.b16 %v138
  %v153 = vpack.c.b16 %v147, %v146
  %v154 = vpack.c.b16 %v149, %v148
  %v155 = vpack.c.b16 %v151, %v150
  %v156 = vpack.c.b16 %v152, %v152
  %vm160 = vcmask 408576
  %v162 = vsel %vm160, %v131, 0
  %vm164 = vcmask 1040384
  %v166 = vsel %vm164, %v156, 0
  %168 = vmatpush.bf16.msra.mxu0 0
  %169 = vmatpush.bf16.msra.mxu0 0
  %170 = vmatpush.bf16.msra.mxu0 0
  %171 = vmatpush.bf16.msra.mxu0 0
  %172 = vmatpush.bf16.msra.mxu0 %v166
  %173 = vmatpush.bf16.msra.mxu0 %v155
  %174 = vmatpush.bf16.msra.mxu0 %v154
  %175 = vmatpush.bf16.msra.mxu0 %v153
  %176 = vmatmul.bf16.gmra.mxu0 %v162
  %v177 = vpop.f32.mrf.mxu0
  %v178 = vadd.f32 0.0, %v177
  %v179 = vpop.f32.mrf.mxu0
  %180 = vdwg.mxu0
  %v181 = vpack.c.bf16 %v178, %v178
  %v182 = vld [vmem:[%s4] sm:$0x1]
  %v184 = vpack.i.b16 %v182, %v182
  %v186 = vperm.slane %v184, 0
  %v187 = vunpack.c.l.bf16 %v181
  %v188 = vunpack.c.l.bf16 %v186
  %v189 = vadd.f32 %v187, %v188
  %v190 = vpack.c.bf16 %v189, %v189
  %v191 = vunpack.c.l.bf16 %v190
  %v192 = vmul.f32 %v191, 0.5
  %v193 = vpack.c.bf16 %v192, %v192
  %v194 = vunpack.c.l.bf16 %v193
  %v195 = vtanh.pop %v194
  %v196 = vpack.c.bf16 %v195, %v195
  %v197 = vunpack.c.l.bf16 %v196
  %v198 = vmul.f32 %v197, 0.5
  %v199 = vpack.c.bf16 %v198, %v198
  %v200 = vunpack.c.l.bf16 %v199
  %v201 = vadd.f32 %v200, 0.5
  %v202 = vpack.c.bf16 %v201, %v201
  %v203 = vld [vmem:[%s5] sm:$0xf]
  %v204 = vld [vmem:[%s5 + $0x4] sm:$0xf]
  %v205 = vld [vmem:[%s5 + $0x8] sm:$0xf]
  %v206 = vld [vmem:[%s5 + $0xc] sm:$0x1]
  %v211 = vunpack.c.l.b16 %v203
  %v212 = vunpack.c.l.b16 %v204
  %v213 = vunpack.c.l.b16 %v205
  %v214 = vunpack.c.l.b16 %v206
  %v215 = vpack.c.b16 %v212, %v211
  %v216 = vpack.c.b16 %v214, %v213
  %vm218 = vcmask 203776
  %v220 = vsel %vm218, %v202, 0
  %vm222 = vcmask 1043456
  %vm223 = vcmask 1044480
  %v224 = vsel %vm222, 4294967295, 65535
  %v225 = vsel %vm223, %v224, 0
  %v227 = vand.u32 %v216, %v225
  %229 = vmatpush.bf16.msra.mxu0 0
  %230 = vmatpush.bf16.msra.mxu0 0
  %231 = vmatpush.bf16.msra.mxu0 0
  %232 = vmatpush.bf16.msra.mxu0 0
  %233 = vmatpush.bf16.msra.mxu0 0
  %234 = vmatpush.bf16.msra.mxu0 0
  %235 = vmatpush.bf16.msra.mxu0 %v227
  %236 = vmatpush.bf16.msra.mxu0 %v215
  %237 = vmatmul.bf16.gmra.mxu0 %v220
  %v238 = vpop.f32.mrf.mxu0
  %v239 = vadd.f32 0.0, %v238
  %v240 = vpop.f32.mrf.mxu0
  %241 = vdwg.mxu0
  %v242 = vpack.c.bf16 %v239, %v239
  %v243 = vld [vmem:[%s6] sm:$0x1]
  %v245 = vpack.i.b16 %v243, %v243
  %v247 = vperm.slane %v245, 0
  %v248 = vunpack.c.l.bf16 %v242
  %v249 = vunpack.c.l.bf16 %v247
  %v250 = vadd.f32 %v248, %v249
  %v251 = vpack.c.bf16 %v250, %v250
  %v252 = vunpack.c.l.bf16 %v251
  %v253 = vmul.f32 %v252, 0.5
  %v254 = vpack.c.bf16 %v253, %v253
  %v255 = vunpack.c.l.bf16 %v254
  %v256 = vtanh.pop %v255
  %v257 = vpack.c.bf16 %v256, %v256
  %v258 = vunpack.c.l.bf16 %v257
  %v259 = vmul.f32 %v258, 0.5
  %v260 = vpack.c.bf16 %v259, %v259
  %v261 = vunpack.c.l.bf16 %v260
  %v262 = vadd.f32 %v261, 0.5
  %v263 = vpack.c.bf16 %v262, %v262
  %v264 = vld [vmem:[%s7] sm:$0xf]
  %v265 = vld [vmem:[%s7 + $0x4] sm:$0x1]
  %v266 = vld [vmem:[#allocation2] sm:$0x1]
  %v268 = vperm.slane %v266, 0
  %v272 = vunpack.c.l.b16 %v264
  %v273 = vunpack.c.l.b16 %v265
  %v274 = vpack.c.b16 %v273, %v272
  %vm275 = vcmask 80896
  %v277 = vsel %vm275, %v263, 0
  %v280 = vsel %vm223, %v274, 0
  %282 = vmatpush.bf16.msra.mxu0 0
  %283 = vmatpush.bf16.msra.mxu0 0
  %284 = vmatpush.bf16.msra.mxu0 0
  %285 = vmatpush.bf16.msra.mxu0 0
  %286 = vmatpush.bf16.msra.mxu0 0
  %287 = vmatpush.bf16.msra.mxu0 0
  %288 = vmatpush.bf16.msra.mxu0 0
  %289 = vmatpush.bf16.msra.mxu0 %v280
  %290 = vmatmul.bf16.gmra.mxu0 %v277
  %v291 = vpop.f32.mrf.mxu0
  %v292 = vadd.f32 %v268, %v291
  %v293 = vpop.f32.mrf.mxu0
  %294 = vdwg.mxu0
  %v295 = vxor.u32 %v292, 2147483648
  %v296 = vmul.f32 %v295, 1.442695
  %v297 = vpow.pop %v296
  %v298 = vadd.f32 %v297, 1.0
  %v299 = vrcp.pop %v298
  %v300 = vmul.f32 %v298, %v299
  %v301 = vsub.f32 1.0, %v300
  %v302 = vmul.f32 %v299, %v301
  %v303 = vadd.f32 %v299, %v302
  %vm304 = vweird.f32 %v298
  %vm305 = vweird.f32 %v299
  %vm306 = vmor %vm304, %vm305
  %v307 = vsel %vm306, %v299, %v303
  %v308 = vand.u32 2147483647, %v298
  %vm309 = vcmp.eq.f32.partialorder %v308, 8.507059e+37
  %v310 = vand.u32 %v298, 2147483648
  %v311 = vor.u32 1.1754944e-38, %v310
  %v312 = vsel %vm309, %v311, %v307
  %v313 = vmul.f32 1.0, %v312
  %vm314 = vcmask 7168
  %315 = vst.msk [vmem:[%s9] sm:$0xff] %vm314, %v313
  // Predicated region
  $region38: #{tpu_custom_call.1} parent=0 // pred_check
    _
  $region39: #{tpu_custom_call.1} parent=0 // pred_check_branch
    %317 = sbr.rel (0) target = $region41
  $region40: #{tpu_custom_call.1} parent=0 // pred_region
    _
  $region41: #{tpu_custom_call.1} parent=0 // pred_fallthru
    _
  // Predicated region
  $region42: #{tpu_custom_call.1} parent=0 // pred_check
    _
  $region43: #{tpu_custom_call.1} parent=0 // pred_check_branch
    %319 = sbr.rel (0) target = $region45
  $region44: #{tpu_custom_call.1} parent=0 // pred_region
    _
  $region45: #{tpu_custom_call.1} parent=0 // pred_fallthru
    _

</llo_original>
